<compile_context>
chip_gen: v5e
topology: v5e:2x2
jax: 0.10.0
libtpu: 0.0.40
codegen_flags: <defaults>
</compile_context>

<pallas_src>
import functools

import jax
import jax.numpy as jnp
from jax.experimental import pallas as pl
from jax.experimental.pallas import tpu as pltpu

BN_EPS = 1e-5


# --------------------------------------------------- VMEM budgets (per core) --

def _vmem_per_core_bytes():
    """Best-effort per-core VMEM capacity; conservative (v7x-sized) fallback."""
    try:
        kind = jax.devices()[0].device_kind.lower()
    except Exception:
        return 64 << 20
    if "v2" in kind or "v3" in kind:
        return 16 << 20
    if "v4" in kind or "v5 lite" in kind or "v5e" in kind or "v6" in kind:
        return 128 << 20
    return 64 << 20              # v7x (64 MiB / TensorCore) and anything unknown


_VMEM_PER_CORE = _vmem_per_core_bytes()
# Budget for the VMEM-resident single-pass path (generation aware: ~40 MiB on
# v7x, ~96 MiB on v5e/v6e), and explicit scoped-VMEM limits for every call.
_FUSED_BUDGET     = max(min(_VMEM_PER_CORE - (24 << 20), 96 << 20), 4 << 20)
_FUSED_VMEM_LIMIT = max(min(_VMEM_PER_CORE - (8 << 20), 112 << 20), 8 << 20)
_TILED_VMEM_LIMIT = max(min(_VMEM_PER_CORE - (16 << 20), 64 << 20), 8 << 20)
_FUSED_MAX_ROWS   = 1024          # keeps the kron matrices tiny (<= 8 MiB)

# Tiled-path block caps: 1024 x 2048 f32 = 8 MiB blocks.  Apply pass uses
# double-buffered in + out ~= 32 MiB, inside every generation's budget above.
_TM_CAP = 1024
_TL_CAP = 2048


def _round_up(x, m):
    return ((x + m - 1) // m) * m


def _tiles(m, l):
    """Fixed lane-dense blocks; pl.cdiv grids handle ragged edges."""
    tm = min(_TM_CAP, _round_up(m, 8))
    tl = min(_TL_CAP, _round_up(l, 128))
    return tm, tl


# ---------------------------------------------------------------- kernels -----

def _fused_kernel(x_ref, a_ref, msel_ref, b_ref, g_ref, beta_ref, o_ref, *, inv_hw):
    """Single-pass ARM: pool -> conv1x1 -> BN(train) -> sigmoid -> multiply.

    Everything lives in the flattened row domain (rows = N*C, lanes = H*W):
      a_ref    = kron(I_N, W^T)          (M, M)   1x1 conv:  y = A @ p + b
      msel_ref = kron(ones(N,N)/N, I_C)  (M, M)   per-channel batch mean
      b/g/beta : conv bias / BN gamma / BN beta tiled per batch, shape (M, 1)
    so no lane<->sublane reshape of tiny tensors is ever required.
    """
    x = x_ref[...].astype(jnp.float32)                                 # (M, HW)
    p = jnp.sum(x, axis=1, keepdims=True) * inv_hw                     # (M, 1)
    y = jnp.dot(a_ref[...], p, preferred_element_type=jnp.float32) + b_ref[...]
    mu = jnp.dot(msel_ref[...], y, preferred_element_type=jnp.float32)
    d = y - mu
    var = jnp.dot(msel_ref[...], d * d, preferred_element_type=jnp.float32)
    s = jax.nn.sigmoid(d * jax.lax.rsqrt(var + BN_EPS) * g_ref[...] + beta_ref[...])
    o_ref[...] = (x * s).astype(o_ref.dtype)


def _pool_kernel(x_ref, o_ref, acc_ref, *, inv_len, total_l, tl, need_mask):
    """Tiled global average pool over the lane (H*W) axis.

    acc_ref is a (TM, 128) f32 partial: 128-lane slices are folded in with VALU
    adds; the single cross-lane (XLU) reduce happens only in the finalize step.
    """
    j = pl.program_id(1)

    @pl.when(j == 0)
    def _():
        acc_ref[...] = jnp.zeros_like(acc_ref)

    def body(ci, acc):
        off = pl.multiple_of(ci * 128, 128)
        xs = x_ref[:, pl.ds(off, 128)].astype(jnp.float32)             # (TM, 128)
        if need_mask:   # ragged H*W: zero out lanes past the real extent
            col = j * tl + ci * 128 + jax.lax.broadcasted_iota(jnp.int32, xs.shape, 1)
            xs = jnp.where(col < total_l, xs, 0.0)
        return acc + xs

    acc_ref[...] = jax.lax.fori_loop(0, tl // 128, body, acc_ref[...], unroll=True)

    @pl.when(j == pl.num_programs(1) - 1)
    def _():
        o_ref[...] = (jnp.sum(acc_ref[...], axis=1, keepdims=True) * inv_len
                      ).astype(o_ref.dtype)


def _apply_kernel(x_ref, s_ref, o_ref):
    """out = x * per-(n, c) scale, broadcast over the lane (H*W) axis."""
    o_ref[...] = (x_ref[...].astype(jnp.float32) * s_ref[...]).astype(o_ref.dtype)


# --------------------------------------------------------------- wrappers -----

def _fused_forward(x2d, n, c, params):
    """Single pallas_call, whole arrays resident in VMEM (1 read + 1 write of x)."""
    m, hw = x2d.shape
    w = params["w"].astype(jnp.float32)                                # (Cin, Cout)
    a = jnp.kron(jnp.eye(n, dtype=jnp.float32), w.T)                   # (M, M)
    msel = jnp.kron(jnp.full((n, n), 1.0 / n, dtype=jnp.float32),
                    jnp.eye(c, dtype=jnp.float32))                     # (M, M)
    b_col = jnp.tile(params["b"].astype(jnp.float32), n).reshape(m, 1)
    g_col = jnp.tile(params["gamma"].astype(jnp.float32), n).reshape(m, 1)
    beta_col = jnp.tile(params["beta"].astype(jnp.float32), n).reshape(m, 1)
    return pl.pallas_call(
        functools.partial(_fused_kernel, inv_hw=1.0 / hw),
        out_shape=jax.ShapeDtypeStruct((m, hw), x2d.dtype),
        compiler_params=pltpu.CompilerParams(vmem_limit_bytes=_FUSED_VMEM_LIMIT),
    )(x2d, a, msel, b_col, g_col, beta_col)


def global_avg_pool(x2d):
    """x2d: (N*C, H*W) -> (N*C, 1) per-row mean (tiled, pipelined)."""
    m, l = x2d.shape
    tm, tl = _tiles(m, l)
    grid = (pl.cdiv(m, tm), pl.cdiv(l, tl))
    return pl.pallas_call(
        functools.partial(_pool_kernel, inv_len=1.0 / l, total_l=l, tl=tl,
                          need_mask=(l % tl != 0)),
        out_shape=jax.ShapeDtypeStruct((m, 1), jnp.float32),
        grid=grid,
        in_specs=[pl.BlockSpec((tm, tl), lambda i, j: (i, j))],
        out_specs=pl.BlockSpec((tm, 1), lambda i, j: (i, 0)),
        scratch_shapes=[pltpu.VMEM((tm, 128), jnp.float32)],
        compiler_params=pltpu.CompilerParams(
            dimension_semantics=("parallel", "arbitrary"),
            vmem_limit_bytes=_TILED_VMEM_LIMIT),
    )(x2d)


def apply_scale(x2d, s_col):
    """x2d: (N*C, H*W), s_col: (N*C, 1) -> x2d * s_col (broadcast over lanes)."""
    m, l = x2d.shape
    tm, tl = _tiles(m, l)
    grid = (pl.cdiv(m, tm), pl.cdiv(l, tl))
    return pl.pallas_call(
        _apply_kernel,
        out_shape=jax.ShapeDtypeStruct((m, l), x2d.dtype),
        grid=grid,
        in_specs=[pl.BlockSpec((tm, tl), lambda i, j: (i, j)),
                  pl.BlockSpec((tm, 1), lambda i, j: (i, 0))],
        out_specs=pl.BlockSpec((tm, tl), lambda i, j: (i, j)),
        compiler_params=pltpu.CompilerParams(
            dimension_semantics=("parallel", "parallel"),
            vmem_limit_bytes=_TILED_VMEM_LIMIT),
    )(x2d, s_col)


def _scale_plain(pooled_col, n, c, params):
    """conv1x1 + training-mode BN + sigmoid on the tiny (N, C) pooled tensor.

    Plain JAX on an (N, C) array -- XLA fuses it; not worth a kernel launch.
    """
    p = pooled_col.reshape(n, c)
    y = p @ params["w"] + params["b"]
    mu = jnp.mean(y, axis=0)
    var = jnp.mean(jnp.square(y - mu), axis=0)            # biased (training BN)
    s = jax.nn.sigmoid((y - mu) * jax.lax.rsqrt(var + BN_EPS) * params["gamma"]
                       + params["beta"])
    return s.reshape(n * c, 1)


def _use_fused(m, hw, itemsize):
    if m > _FUSED_MAX_ROWS:
        return False
    est = (2 * m * hw * itemsize          # x-in + out VMEM buffers
           + 2 * m * hw * 4               # f32 working copies inside the kernel
           + 2 * m * m * 4                # kron(conv) + kron(batch-mean) matrices
           + (2 << 20))                   # slack
    return est <= _FUSED_BUDGET


def _arm_forward_impl(x_nchw, params, force_tiled=False):
    n, c, h, w = x_nchw.shape
    m, hw = n * c, h * w
    x2d = x_nchw.reshape(m, hw)           # NCHW kept as-is: rows=(n,c), lanes=(h,w)
    if (not force_tiled) and _use_fused(m, hw, x_nchw.dtype.itemsize):
        out2d = _fused_forward(x2d, n, c, params)          # 1 read + 1 write of x
    else:
        pooled = global_avg_pool(x2d)                       # read #1 of x
        s_col = _scale_plain(pooled, n, c, params)          # tiny, fused by XLA
        out2d = apply_scale(x2d, s_col)                     # read #2 + write of x
    return out2d.reshape(n, c, h, w)


arm_forward = jax.jit(_arm_forward_impl)
arm_forward_tiled = jax.jit(functools.partial(_arm_forward_impl, force_tiled=True))


# ------------------------------------------------------------- reference ------

def ref_forward(x, params):
    """Pure-JAX reference for correctness checking."""
    pooled = x.mean(axis=(2, 3))                            # (N, C)
    y = pooled @ params["w"] + params["b"]                  # 1x1 conv
    mu = y.mean(axis=0)
    var = jnp.var(y, axis=0)                                # biased (training BN)
    s = jax.nn.sigmoid((y - mu) / jnp.sqrt(var + BN_EPS) * params["gamma"]
                       + params["beta"])
    return x * s[:, :, None, None]


def init_params(key, channels):
    kw, kb = jax.random.split(key)
    return {
        # conv weight stored as (Cin, Cout): the 1x1 conv is pooled @ w + b
        "w": 0.3 * jax.random.normal(kw, (channels, channels), jnp.float32),
        "b": 0.1 * jax.random.normal(kb, (channels,), jnp.float32),
        "gamma": jnp.ones((channels,), jnp.float32),        # BatchNorm2d defaults
        "beta": jnp.zeros((channels,), jnp.float32),
    }


if __name__ == "__main__":
    # ARM(input_h=16, input_w=16, channels=4), batch 2 -- the spec's small shape.
    N, C, H, W = 2, 4, 16, 16
    key = jax.random.PRNGKey(0)
    k_x, k_p = jax.random.split(key)
    x = jax.random.normal(k_x, (N, C, H, W), jnp.float32)   # NCHW like PyTorch
    params = init_params(k_p, C)
    ref = ref_forward(x, params)

    out = jax.block_until_ready(arm_forward(x, params))     # fused VMEM-resident path
    assert out.shape == (N, C, H, W)
    assert jnp.allclose(out, ref, rtol=1e-5, atol=1e-5), "fused path mismatch"

    out_t = jax.block_until_ready(arm_forward_tiled(x, params))   # tiled path
    assert jnp.allclose(out_t, ref, rtol=1e-5, atol=1e-5), "tiled path mismatch"

    # Robustness check: ragged spatial size (H*W = 2145, not a multiple of 128,
    # spanning 2 lane blocks) and a non-multiple-of-8 row count -- exercises the
    # cdiv grids, the pool lane mask and the padded-row writeback.  Training-mode
    # BN on a tiny batch is ill-conditioned when the batch variance ~ eps, so the
    # reference comparison uses a slightly looser tolerance here.
    N2, C2, H2, W2 = 3, 5, 33, 65
    key2 = jax.random.PRNGKey(1)
    k_x2, k_p2 = jax.random.split(key2)
    x2 = jax.random.normal(k_x2, (N2, C2, H2, W2), jnp.float32)
    params2 = init_params(k_p2, C2)
    ref2 = ref_forward(x2, params2)
    out2 = jax.block_until_ready(arm_forward(x2, params2))
    out2_t = jax.block_until_ready(arm_forward_tiled(x2, params2))
    assert jnp.allclose(out2, ref2, rtol=2e-4, atol=2e-4), "fused ragged mismatch"
    assert jnp.allclose(out2_t, ref2, rtol=2e-4, atol=2e-4), "tiled ragged mismatch"

    print("KERNEL_OK")
</pallas_src>

<mosaic_0001>
module attributes {stable_mosaic.version = 11 : i64} {
  func.func @_fused_kernel(%arg0: memref<8x256xf32, #tpu.memory_space<vmem>>, %arg1: memref<8x8xf32, #tpu.memory_space<vmem>>, %arg2: memref<8x8xf32, #tpu.memory_space<vmem>>, %arg3: memref<8x1xf32, #tpu.memory_space<vmem>>, %arg4: memref<8x1xf32, #tpu.memory_space<vmem>>, %arg5: memref<8x1xf32, #tpu.memory_space<vmem>>, %arg6: memref<8x256xf32, #tpu.memory_space<vmem>>) attributes {dimension_semantics = [], scalar_prefetch = 0 : i64, scratch_operands = 0 : i64, tpu.core_type = #tpu.core_type<tc>} {
    %c0 = arith.constant 0 : index
    %c0_0 = arith.constant 0 : index
    %0 = vector.load %arg0[%c0, %c0_0] : memref<8x256xf32, #tpu.memory_space<vmem>>, vector<8x256xf32>
    %cst = arith.constant dense<0.000000e+00> : vector<8xf32>
    %1 = vector.multi_reduction <add>, %0, %cst [1] : vector<8x256xf32> to vector<8xf32>
    %2 = vector.shape_cast %1 : vector<8xf32> to vector<8x1xf32>
    %cst_1 = arith.constant 3.906250e-03 : f32
    %3 = vector.broadcast %cst_1 : f32 to vector<8x1xf32>
    %4 = arith.mulf %2, %3 : vector<8x1xf32>
    %c0_2 = arith.constant 0 : index
    %c0_3 = arith.constant 0 : index
    %5 = vector.load %arg1[%c0_2, %c0_3] : memref<8x8xf32, #tpu.memory_space<vmem>>, vector<8x8xf32>
    %cst_4 = arith.constant dense<0.000000e+00> : vector<8x1xf32>
    %6 = tpu.matmul %5, %4, %cst_4 {dimension_numbers = #tpu.dot_dimension_numbers<[1], [0], [0], [1], [0, 0, 1, 1], [], []>} : vector<8x8xf32>, vector<8x1xf32>, vector<8x1xf32> -> vector<8x1xf32>
    %c0_5 = arith.constant 0 : index
    %c0_6 = arith.constant 0 : index
    %7 = vector.load %arg3[%c0_5, %c0_6] : memref<8x1xf32, #tpu.memory_space<vmem>>, vector<8x1xf32>
    %8 = arith.addf %6, %7 : vector<8x1xf32>
    %c0_7 = arith.constant 0 : index
    %c0_8 = arith.constant 0 : index
    %9 = vector.load %arg2[%c0_7, %c0_8] : memref<8x8xf32, #tpu.memory_space<vmem>>, vector<8x8xf32>
    %cst_9 = arith.constant dense<0.000000e+00> : vector<8x1xf32>
    %10 = tpu.matmul %9, %8, %cst_9 {dimension_numbers = #tpu.dot_dimension_numbers<[1], [0], [0], [1], [0, 0, 1, 1], [], []>} : vector<8x8xf32>, vector<8x1xf32>, vector<8x1xf32> -> vector<8x1xf32>
    %11 = arith.subf %8, %10 : vector<8x1xf32>
    %c0_10 = arith.constant 0 : index
    %c0_11 = arith.constant 0 : index
    %12 = vector.load %arg2[%c0_10, %c0_11] : memref<8x8xf32, #tpu.memory_space<vmem>>, vector<8x8xf32>
    %13 = arith.mulf %11, %11 : vector<8x1xf32>
    %cst_12 = arith.constant dense<0.000000e+00> : vector<8x1xf32>
    %14 = tpu.matmul %12, %13, %cst_12 {dimension_numbers = #tpu.dot_dimension_numbers<[1], [0], [0], [1], [0, 0, 1, 1], [], []>} : vector<8x8xf32>, vector<8x1xf32>, vector<8x1xf32> -> vector<8x1xf32>
    %cst_13 = arith.constant 9.99999974E-6 : f32
    %15 = vector.broadcast %cst_13 : f32 to vector<8x1xf32>
    %16 = arith.addf %14, %15 : vector<8x1xf32>
    %17 = math.rsqrt %16 : vector<8x1xf32>
    %18 = arith.mulf %11, %17 : vector<8x1xf32>
    %c0_14 = arith.constant 0 : index
    %c0_15 = arith.constant 0 : index
    %19 = vector.load %arg4[%c0_14, %c0_15] : memref<8x1xf32, #tpu.memory_space<vmem>>, vector<8x1xf32>
    %20 = arith.mulf %18, %19 : vector<8x1xf32>
    %c0_16 = arith.constant 0 : index
    %c0_17 = arith.constant 0 : index
    %21 = vector.load %arg5[%c0_16, %c0_17] : memref<8x1xf32, #tpu.memory_space<vmem>>, vector<8x1xf32>
    %22 = arith.addf %20, %21 : vector<8x1xf32>
    %23 = arith.negf %22 : vector<8x1xf32>
    %24 = math.exp %23 : vector<8x1xf32>
    %cst_18 = arith.constant 1.000000e+00 : f32
    %25 = vector.broadcast %cst_18 : f32 to vector<8x1xf32>
    %26 = arith.addf %25, %24 : vector<8x1xf32>
    %27 = arith.divf %25, %26 : vector<8x1xf32>
    %28 = vector.broadcast %27 : vector<8x1xf32> to vector<8x256xf32>
    %29 = arith.mulf %0, %28 : vector<8x256xf32>
    %c0_19 = arith.constant 0 : index
    %c0_20 = arith.constant 0 : index
    %30 = vector.load %arg6[%c0_19, %c0_20] : memref<8x256xf32, #tpu.memory_space<vmem>>, vector<8x256xf32>
    tpu.vector_store %arg6[%c0_19, %c0_20], %29 {strides = array<i32>} : memref<8x256xf32, #tpu.memory_space<vmem>>, vector<8x256xf32>,
    return
  }
}

</mosaic_0001>

<llo_original>
// kernel: tile.28
$region0: #{tile.28}
  #allocation0 [shape = 's32[1]{0}', space=sflag, size = 0x4, scoped, tag = 'scoped memory for tile.28']
  %s0 = inlined_call_operand.vmem [shape: f32[4], index: 0, kind: input, shape index: {}]
  %s1 = inlined_call_operand.vmem [shape: f32[2,4], index: 1, kind: output, shape index: {}]
  // Predicated region
  $region2: #{tile.28} parent=0 // pred_check
    _
  $region3: #{tile.28} parent=0 // pred_check_branch
    %3 = sbr.rel (0) target = $region5
  $region4: #{tile.28} parent=0 // pred_region
    _
  $region5: #{tile.28} parent=0 // pred_fallthru
    _
  %v4 = vld [vmem:[%s0] ss:$0 sm:$0xff]
  %5 = vst [vmem:[%s1] sm:$0x3] %v4

// kernel: tile.18
$region0: #{tile.18}
  #allocation2 [shape = 's32[1]{0}', space=sflag, size = 0x4, scoped, tag = 'scoped memory for tile.18']
  %s0 = inlined_call_operand.hbm [shape: f32[4], index: 0, kind: input, shape index: {}]
  %s1 = inlined_call_operand.vmem [shape: f32[2,4], index: 1, kind: output, shape index: {}]
  $region1: #{tile.18} parent=0
    #allocation0 [shape = 'u8[512]{0}', space=vmem, size = 0x400, scoped, tag = 'operand span for operand 0']
    #allocation1 [shape = 's32[1]{0}', space=sflag, size = 0x4, scoped, tag = 'scoped memory for tile.18']
    %2 = vsyncpa [#allocation1], 0
    // Predicated region
    $region2: #{tile.18} parent=1 // pred_check
      _
    $region3: #{tile.18} parent=1 // pred_check_branch
      %4 = sbr.rel (0) target = $region5
    $region4: #{tile.18} parent=1 // pred_region
      %6 = vsyncadd [#allocation1], 0
      %s8 = sshll.u32 %s0, 4
      %s9 = int_to_ptr.hbm [resolvable:$true] %s8
      %s10 = sshll.u32 [#allocation0], 4
      %s11 = int_to_ptr.vmem [resolvable:$true] %s10
      %13 = dma.hbm_to_vmem [thread:$0]  %s9, 16, %s11, [#allocation1]
    $region5: #{tile.18} parent=1 // pred_fallthru
      _
    // Predicated region
    $region6: #{tile.18} parent=1 // pred_check
      _
    $region7: #{tile.18} parent=1 // pred_check_branch
      %15 = sbr.rel (0) target = $region9
    $region8: #{tile.18} parent=1 // pred_region
      %17 = dma.done [#allocation1], 16
    $region9: #{tile.18} parent=1 // pred_fallthru
      _
    %v18 = vld [vmem:[#allocation0] ss:$0 sm:$0xff]
    %19 = vst [vmem:[%s1] sm:$0x3] %v18
    %20 = vsyncpa [#allocation1], 1

// kernel: tile.1
$region0: #{tile.1}
  %s0 = inlined_call_operand.vmem [shape: f32[2,4], index: 0, kind: input, shape index: {}]
  %s1 = inlined_call_operand.vmem [shape: f32[8,1], index: 1, kind: output, shape index: {}]
  $region1: #{tile.1} parent=0
    #allocation0 [shape = 'u8[4096]{0}', space=vmem, size = 0x1000, scoped, tag = 'scoped mem for input reshape']
    %s3 = ssub.s32 4, 1
    %v4 = vld [vmem:[%s0] sm:%s3]
    %5 = vst [vmem:[#allocation0] sm:%s3] %v4
    %v6 = vld [vmem:[#allocation0] sm:$0x3]
    %vm7 = vcmask 7168
    %8 = vst.msk [vmem:[%s1] ss:$4 sm:$0x3] %vm7, %v6
    %v9 = vld [vmem:[#allocation0] sm:$0x3]
    %10 = vrot.lane.b32.xlu0 %v9, 127
    %v11 = vpop.permute.xlu0 %10
    %vm12 = vcmask 7168
    %s13 = scalar_lea.vmem %s1, 1
    %14 = vst.msk [vmem:[%s13] ss:$4 sm:$0x3] %vm12, %v11
    %v15 = vld [vmem:[#allocation0] sm:$0x3]
    %16 = vrot.lane.b32.xlu0 %v15, 126
    %v17 = vpop.permute.xlu0 %16
    %vm18 = vcmask 7168
    %s19 = scalar_lea.vmem %s1, 2
    %20 = vst.msk [vmem:[%s19] ss:$4 sm:$0x3] %vm18, %v17
    %v21 = vld [vmem:[#allocation0] sm:$0x3]
    %22 = vrot.lane.b32.xlu0 %v21, 125
    %v23 = vpop.permute.xlu0 %22
    %vm24 = vcmask 7168
    %s25 = scalar_lea.vmem %s1, 3
    %26 = vst.msk [vmem:[%s25] ss:$4 sm:$0x3] %vm24, %v23

// kernel: _arm_forward_impl.1
$region0: #{_arm_forward_impl.1}
  #allocation0 [shape = 'u32[]', space=smem, size = 0x4, offset = 0x4, fixed_abs, tag = 'smem constant byte address 0x4 - core index']
  #allocation1 [shape = 'u32[72,128]{1,0:T(1,128)}', space=vmem, size = 0x9000, scoped, tag = 'internal scratch']
  %s0 = inlined_call_operand.vmem [shape: f32[8,256], index: 0, kind: input, shape index: {}]
  %s1 = inlined_call_operand.vmem [shape: f32[8,8], index: 1, kind: input, shape index: {}]
  %s2 = inlined_call_operand.vmem [shape: f32[8,8], index: 2, kind: input, shape index: {}]
  %s3 = inlined_call_operand.vmem [shape: f32[8,1], index: 3, kind: input, shape index: {}]
  %s4 = inlined_call_operand.vmem [shape: f32[8,1], index: 4, kind: input, shape index: {}]
  %s5 = inlined_call_operand.vmem [shape: f32[8,1], index: 5, kind: input, shape index: {}]
  %s6 = inlined_call_operand.vmem [shape: f32[8,256], index: 6, kind: output, shape index: {}]
  %s7 = sld [smem:[#allocation0]]
  $region34: #{_arm_forward_impl.1} parent=0
    _
  %s9 = ssub.s32 1, %s7
  %s10 = scalar_select 0, %s9, %s7
  // Predicated region
  $region2: #{_arm_forward_impl.1} parent=0 // pred_check
    _
  $region3: #{_arm_forward_impl.1} parent=0 // pred_check_branch
    %12 = sbr.rel (0) target = $region5
  $region4: #{_arm_forward_impl.1} parent=0 // pred_region
    _
  $region5: #{_arm_forward_impl.1} parent=0 // pred_fallthru
    _
  // Predicated region
  $region6: #{_arm_forward_impl.1} parent=0 // pred_check
    _
  $region7: #{_arm_forward_impl.1} parent=0 // pred_check_branch
    %14 = sbr.rel (0) target = $region9
  $region8: #{_arm_forward_impl.1} parent=0 // pred_region
    _
  $region9: #{_arm_forward_impl.1} parent=0 // pred_fallthru
    _
  // Predicated region
  $region10: #{_arm_forward_impl.1} parent=0 // pred_check
    _
  $region11: #{_arm_forward_impl.1} parent=0 // pred_check_branch
    %16 = sbr.rel (0) target = $region13
  $region12: #{_arm_forward_impl.1} parent=0 // pred_region
    _
  $region13: #{_arm_forward_impl.1} parent=0 // pred_fallthru
    _
  // Predicated region
  $region14: #{_arm_forward_impl.1} parent=0 // pred_check
    _
  $region15: #{_arm_forward_impl.1} parent=0 // pred_check_branch
    %18 = sbr.rel (0) target = $region17
  $region16: #{_arm_forward_impl.1} parent=0 // pred_region
    _
  $region17: #{_arm_forward_impl.1} parent=0 // pred_fallthru
    _
  // Predicated region
  $region18: #{_arm_forward_impl.1} parent=0 // pred_check
    _
  $region19: #{_arm_forward_impl.1} parent=0 // pred_check_branch
    %20 = sbr.rel (0) target = $region21
  $region20: #{_arm_forward_impl.1} parent=0 // pred_region
    _
  $region21: #{_arm_forward_impl.1} parent=0 // pred_fallthru
    _
  // Predicated region
  $region22: #{_arm_forward_impl.1} parent=0 // pred_check
    _
  $region23: #{_arm_forward_impl.1} parent=0 // pred_check_branch
    %22 = sbr.rel (0) target = $region25
  $region24: #{_arm_forward_impl.1} parent=0 // pred_region
    _
  $region25: #{_arm_forward_impl.1} parent=0 // pred_fallthru
    _
  %v23 = vld [vmem:[%s0] sm:$0xff]
  %v24 = vld [vmem:[%s0 + $0x8] sm:$0xff]
  %v25 = vadd.f32 %v23, %v24
  %26 = vadd.xlane.f32.xlu0 %v25
  %v27 = vpop.xlane.xlu0 %26
  %v28 = vmul.f32 %v27, 0.00390625
  %v29 = vld [vmem:[%s1] sm:$0xff]
  %v30 = vld [vmem:[%s3] sm:$0xff]
  %vm31 = vcmask 64512
  %v33 = vsel %vm31, %v29, 0
  %35 = vmatpush.msra.mxu0 0.0
  %36 = vmatpush.msra.mxu0 0.0
  %37 = vmatpush.msra.mxu0 0.0
  %38 = vmatpush.msra.mxu0 0.0
  %39 = vmatpush.msra.mxu0 0.0
  %40 = vmatpush.msra.mxu0 0.0
  %41 = vmatpush.msra.mxu0 0.0
  %42 = vmatpush.msra.mxu0 0.0
  %43 = vmatpush.msra.mxu0 0.0
  %44 = vmatpush.msra.mxu0 0.0
  %45 = vmatpush.msra.mxu0 0.0
  %46 = vmatpush.msra.mxu0 0.0
  %47 = vmatpush.msra.mxu0 0.0
  %48 = vmatpush.msra.mxu0 0.0
  %49 = vmatpush.msra.mxu0 0.0
  %50 = vmatpush.msra.mxu0 %v28
  %51 = vmatmul.f32.gmra.mxu0 %v33
  %v52 = vpop.f32.mrf.mxu0
  %v53 = vadd.f32 %v30, %v52
  %54 = vdwg.mxu0
  %v55 = vld [vmem:[%s2] sm:$0xff]
  %v57 = vsel %vm31, %v55, 0
  %59 = vmatpush.msra.mxu0 0.0
  %60 = vmatpush.msra.mxu0 0.0
  %61 = vmatpush.msra.mxu0 0.0
  %62 = vmatpush.msra.mxu0 0.0
  %63 = vmatpush.msra.mxu0 0.0
  %64 = vmatpush.msra.mxu0 0.0
  %65 = vmatpush.msra.mxu0 0.0
  %66 = vmatpush.msra.mxu0 0.0
  %67 = vmatpush.msra.mxu0 0.0
  %68 = vmatpush.msra.mxu0 0.0
  %69 = vmatpush.msra.mxu0 0.0
  %70 = vmatpush.msra.mxu0 0.0
  %71 = vmatpush.msra.mxu0 0.0
  %72 = vmatpush.msra.mxu0 0.0
  %73 = vmatpush.msra.mxu0 0.0
  %74 = vmatpush.msra.mxu0 %v53
  %75 = vmatmul.f32.gmra.mxu0 %v57
  %v76 = vpop.f32.mrf.mxu0
  %v77 = vadd.f32 0.0, %v76
  %78 = vdwg.mxu0
  %v79 = vsub.f32 %v53, %v77
  %v80 = vmul.f32 %v79, %v79
  %81 = vmatpush.msra.mxu0 0.0
  %82 = vmatpush.msra.mxu0 0.0
  %83 = vmatpush.msra.mxu0 0.0
  %84 = vmatpush.msra.mxu0 0.0
  %85 = vmatpush.msra.mxu0 0.0
  %86 = vmatpush.msra.mxu0 0.0
  %87 = vmatpush.msra.mxu0 0.0
  %88 = vmatpush.msra.mxu0 0.0
  %89 = vmatpush.msra.mxu0 0.0
  %90 = vmatpush.msra.mxu0 0.0
  %91 = vmatpush.msra.mxu0 0.0
  %92 = vmatpush.msra.mxu0 0.0
  %93 = vmatpush.msra.mxu0 0.0
  %94 = vmatpush.msra.mxu0 0.0
  %95 = vmatpush.msra.mxu0 0.0
  %96 = vmatpush.msra.mxu0 %v80
  %97 = vmatmul.f32.gmra.mxu0 %v57
  %v98 = vpop.f32.mrf.mxu0
  %v99 = vadd.f32 1e-05, %v98
  %100 = vdwg.mxu0
  %v101 = vrsqrt.pop %v99
  %v102 = vmul.f32 %v101, %v99
  %v103 = vmul.f32 %v102, %v101
  %v104 = vmul.f32 0.5, %v103
  %v105 = vsub.f32 1.5, %v104
  %v106 = vmul.f32 %v101, %v105
  %vm107 = vweird.f32 %v99
  %vm108 = vweird.f32 %v101
  %vm109 = vmor %vm107, %vm108
  %v110 = vsel %vm109, %v101, %v106
  %v111 = vmul.f32 %v79, %v110
  %v112 = vld [vmem:[%s4] sm:$0xff]
  %v113 = vmul.f32 %v111, %v112
  %v114 = vld [vmem:[%s5] sm:$0xff]
  %v115 = vadd.f32 %v113, %v114
  %v116 = vxor.u32 %v115, 2147483648
  %v117 = vmul.f32 %v116, 1.442695
  %v118 = vpow.pop %v117
  %v119 = vadd.f32 %v118, 1.0
  %v120 = vrcp.pop %v119
  %v121 = vmul.f32 %v119, %v120
  %v122 = vsub.f32 1.0, %v121
  %v123 = vmul.f32 %v120, %v122
  %v124 = vadd.f32 %v120, %v123
  %vm125 = vweird.f32 %v119
  %vm126 = vweird.f32 %v120
  %vm127 = vmor %vm125, %vm126
  %v128 = vsel %vm127, %v120, %v124
  %v129 = vand.u32 2147483647, %v119
  %vm130 = vcmp.eq.f32.partialorder %v129, 8.507059e+37
  %v131 = vand.u32 %v119, 2147483648
  %v132 = vor.u32 1.1754944e-38, %v131
  %v133 = vsel %vm130, %v132, %v128
  %v134 = vmul.f32 1.0, %v133
  %136 = vset.pattern.permute.xlu0 0
  %137 = vperm.xlu0 %136, %v134
  %v138 = vpop.permute.xlu0 %137
  %v140 = vmul.f32 %v23, %v138
  %v141 = vmul.f32 %v24, %v138
  %142 = vst [vmem:[%s6] sm:$0xff] %v140
  %143 = vst [vmem:[%s6 + $0x8] sm:$0xff] %v141
  // Predicated region
  $region26: #{_arm_forward_impl.1} parent=0 // pred_check
    _
  $region27: #{_arm_forward_impl.1} parent=0 // pred_check_branch
    %145 = sbr.rel (0) target = $region29
  $region28: #{_arm_forward_impl.1} parent=0 // pred_region
    _
  $region29: #{_arm_forward_impl.1} parent=0 // pred_fallthru
    _
  // Predicated region
  $region30: #{_arm_forward_impl.1} parent=0 // pred_check
    _
  $region31: #{_arm_forward_impl.1} parent=0 // pred_check_branch
    %147 = sbr.rel (0) target = $region33
  $region32: #{_arm_forward_impl.1} parent=0 // pred_region
    _
  $region33: #{_arm_forward_impl.1} parent=0 // pred_fallthru
    _

</llo_original>
